<compile_context>
chip_gen: v7x
topology: tpu7x:2x2x1
jax: 0.10.0
libtpu: 0.0.40
codegen_flags: <defaults>
</compile_context>

<pallas_src>
import jax
import jax.numpy as jnp
from jax.experimental import pallas as pl
from jax.experimental.pallas import tpu as pltpu

# Packed parameter slab layout, shape (8, 128) float32:
#   rows 0..3 : w1    (4,128)   affine1 weight, stored as (in, out)
#   row  4    : b1    (128,)    affine1 bias
#   rows 5..6 : w2^T  (2,128)   affine2 weight, stored transposed (out, in)
#   row  7    : [b2_0, b2_1, 0, ...]  affine2 bias in lanes 0..1
_PARAM_ROWS = 8
_IN = 4
_HIDDEN = 128
_OUT = 2


def policy_kernel(x_ref, p_ref, out_ref):
    x = x_ref[...]                                   # (TB, 4)
    w1 = p_ref[0:4, :]                               # (4, 128)
    b1 = p_ref[4:5, :]                               # (1, 128)
    w2t = p_ref[5:7, :]                              # (2, 128)

    # affine1 (MXU) + dropout(identity, eval) + ReLU (VPU)
    h = jnp.dot(x, w1, preferred_element_type=jnp.float32) + b1   # (TB, 128)
    h = jnp.maximum(h, 0.0)

    # affine2 + 2-class softmax, folded into the exact sigmoid identity:
    #   softmax([s0, s1]) = [sigmoid(s0 - s1), 1 - sigmoid(s0 - s1)]
    #   s0 - s1 = h . (w2[:,0] - w2[:,1]) + (b2_0 - b2_1)
    wd = w2t[0:1, :] - w2t[1:2, :]                   # (1, 128)  VPU
    bd = p_ref[7:8, 0:1] - p_ref[7:8, 1:2]           # (1, 1)
    d = jnp.sum(h * wd, axis=1, keepdims=True) + bd  # (TB, 1)   VPU + lane-sum
    p0 = jax.nn.sigmoid(d)                           # EUP

    # Single full-block store: lane 0 -> p0, lane 1 -> 1 - p0.
    lane = jax.lax.broadcasted_iota(jnp.int32, out_ref.shape, 1)
    out_ref[...] = jnp.where(lane == 0, p0, 1.0 - p0)


def pack_params(w1, b1, w2, b2):
    """Pack (4,128), (128,), (128,2), (2,) params into one (8,128) f32 slab."""
    slab = jnp.zeros((_PARAM_ROWS, _HIDDEN), jnp.float32)
    slab = slab.at[0:4, :].set(w1.astype(jnp.float32))
    slab = slab.at[4, :].set(b1.reshape(-1).astype(jnp.float32))
    slab = slab.at[5:7, :].set(w2.astype(jnp.float32).T)
    slab = slab.at[7, 0:2].set(b2.reshape(-1).astype(jnp.float32))
    return slab


def _batch_tile(batch):
    if batch <= 2048:
        return batch                      # single whole-batch block
    for tb in (2048, 1024, 512, 256, 128, 64, 32, 16, 8):
        if batch % tb == 0:
            return tb
    return batch                          # irregular batch: one whole block


def policy_forward(x, packed_params):
    batch = x.shape[0]
    tb = _batch_tile(batch)
    grid = (batch // tb,)
    cost = pl.CostEstimate(
        flops=2 * batch * _IN * _HIDDEN + 2 * batch * _HIDDEN * _OUT,
        transcendentals=batch,
        bytes_accessed=4 * (batch * _IN + _PARAM_ROWS * _HIDDEN + batch * _OUT),
    )
    return pl.pallas_call(
        policy_kernel,
        out_shape=jax.ShapeDtypeStruct((batch, _OUT), jnp.float32),
        grid=grid,
        in_specs=[
            pl.BlockSpec((tb, _IN), lambda i: (i, 0)),
            pl.BlockSpec((_PARAM_ROWS, _HIDDEN), lambda i: (0, 0)),
        ],
        out_specs=pl.BlockSpec((tb, _OUT), lambda i: (i, 0)),
        compiler_params=pltpu.CompilerParams(
            dimension_semantics=("parallel",),
        ),
        cost_estimate=cost,
    )(x, packed_params)


if __name__ == "__main__":
    key = jax.random.PRNGKey(0)
    kx, kp = jax.random.split(key)

    # PyTorch nn.Linear default init: U(-1/sqrt(fan_in), +1/sqrt(fan_in)).
    k1, k2, k3, k4 = jax.random.split(kp, 4)
    bound1 = 1.0 / jnp.sqrt(4.0)
    bound2 = 1.0 / jnp.sqrt(128.0)
    w1 = jax.random.uniform(k1, (_IN, _HIDDEN), jnp.float32, -bound1, bound1)
    b1 = jax.random.uniform(k2, (_HIDDEN,), jnp.float32, -bound1, bound1)
    w2 = jax.random.uniform(k3, (_HIDDEN, _OUT), jnp.float32, -bound2, bound2)
    b2 = jax.random.uniform(k4, (_OUT,), jnp.float32, -bound2, bound2)
    params = pack_params(w1, b1, w2, b2)

    def reference(xb):
        h = jnp.maximum(xb @ w1 + b1, 0.0)        # dropout == identity (eval)
        return jax.nn.softmax(h @ w2 + b2, axis=1)

    # Small batch: single block, grid=(1,).
    B = 16
    x = jax.random.normal(kx, (B, _IN), jnp.float32)
    out = jax.block_until_ready(policy_forward(x, params))
    assert out.shape == (B, _OUT)
    assert jnp.allclose(out, reference(x), atol=1e-5, rtol=1e-5)
    assert jnp.allclose(jnp.sum(out, axis=1), 1.0, atol=1e-5)

    # Larger batch exercising the tiled "parallel" grid path (multiple tiles).
    B2 = 4096
    x2 = jax.random.normal(kx, (B2, _IN), jnp.float32)
    out2 = jax.block_until_ready(policy_forward(x2, params))
    assert out2.shape == (B2, _OUT)
    assert jnp.allclose(out2, reference(x2), atol=1e-5, rtol=1e-5)

    # Odd batch (not a multiple of 8): single whole-batch block path.
    B3 = 3
    x3 = jax.random.normal(kx, (B3, _IN), jnp.float32)
    out3 = jax.block_until_ready(policy_forward(x3, params))
    assert out3.shape == (B3, _OUT)
    assert jnp.allclose(out3, reference(x3), atol=1e-5, rtol=1e-5)

    print("KERNEL_OK")
</pallas_src>

<mosaic_0001>
module attributes {stable_mosaic.version = 11 : i64} {
  func.func @policy_kernel(%arg0: i32, %arg1: memref<16x4xf32, #tpu.memory_space<vmem>>, %arg2: memref<8x128xf32, #tpu.memory_space<vmem>>, %arg3: memref<16x2xf32, #tpu.memory_space<vmem>>) attributes {dimension_semantics = [#tpu.dimension_semantics<parallel>], iteration_bounds = array<i64: 1>, scalar_prefetch = 0 : i64, scratch_operands = 0 : i64, tpu.core_type = #tpu.core_type<tc>, window_params = [{transform_indices = @transform_0, window_bounds = array<i64: 16, 4>}, {pipeline_mode = #tpu.pipeline_mode<synchronous>, transform_indices = @transform_1, window_bounds = array<i64: 8, 128>}, {transform_indices = @transform_2, window_bounds = array<i64: 16, 2>}]} {
    %c0 = arith.constant 0 : index
    %c0_0 = arith.constant 0 : index
    %0 = vector.load %arg1[%c0, %c0_0] : memref<16x4xf32, #tpu.memory_space<vmem>>, vector<16x4xf32>
    %c0_1 = arith.constant 0 : index
    %c0_2 = arith.constant 0 : index
    %1 = vector.load %arg2[%c0_1, %c0_2] : memref<8x128xf32, #tpu.memory_space<vmem>>, vector<4x128xf32>
    %c4 = arith.constant 4 : index
    %c0_3 = arith.constant 0 : index
    %2 = vector.load %arg2[%c4, %c0_3] : memref<8x128xf32, #tpu.memory_space<vmem>>, vector<1x128xf32>
    %c5 = arith.constant 5 : index
    %c0_4 = arith.constant 0 : index
    %3 = vector.load %arg2[%c5, %c0_4] : memref<8x128xf32, #tpu.memory_space<vmem>>, vector<2x128xf32>
    %cst = arith.constant dense<0.000000e+00> : vector<16x128xf32>
    %4 = tpu.matmul %0, %1, %cst {dimension_numbers = #tpu.dot_dimension_numbers<[1], [0], [0], [1], [0, 0, 1, 1], [], []>} : vector<16x4xf32>, vector<4x128xf32>, vector<16x128xf32> -> vector<16x128xf32>
    %5 = vector.broadcast %2 : vector<1x128xf32> to vector<16x128xf32>
    %6 = arith.addf %4, %5 : vector<16x128xf32>
    %cst_5 = arith.constant 0.000000e+00 : f32
    %7 = vector.broadcast %cst_5 : f32 to vector<16x128xf32>
    %8 = arith.maximumf %6, %7 : vector<16x128xf32>
    %9 = vector.extract_strided_slice %3 {offsets = [0, 0], sizes = [1, 128], strides = [1, 1]} : vector<2x128xf32> to vector<1x128xf32>
    %10 = vector.extract_strided_slice %3 {offsets = [1, 0], sizes = [1, 128], strides = [1, 1]} : vector<2x128xf32> to vector<1x128xf32>
    %11 = arith.subf %9, %10 : vector<1x128xf32>
    %c7 = arith.constant 7 : index
    %c0_6 = arith.constant 0 : index
    %12 = vector.load %arg2[%c7, %c0_6] : memref<8x128xf32, #tpu.memory_space<vmem>>, vector<1x1xf32>
    %c7_7 = arith.constant 7 : index
    %c1 = arith.constant 1 : index
    %13 = vector.load %arg2[%c7_7, %c1] : memref<8x128xf32, #tpu.memory_space<vmem>>, vector<1x1xf32>
    %14 = arith.subf %12, %13 : vector<1x1xf32>
    %15 = vector.broadcast %11 : vector<1x128xf32> to vector<16x128xf32>
    %16 = arith.mulf %8, %15 : vector<16x128xf32>
    %cst_8 = arith.constant dense<0.000000e+00> : vector<16xf32>
    %17 = vector.multi_reduction <add>, %16, %cst_8 [1] : vector<16x128xf32> to vector<16xf32>
    %18 = vector.shape_cast %17 : vector<16xf32> to vector<16x1xf32>
    %19 = vector.broadcast %14 : vector<1x1xf32> to vector<16x1xf32>
    %20 = arith.addf %18, %19 : vector<16x1xf32>
    %21 = arith.negf %20 : vector<16x1xf32>
    %22 = math.exp %21 : vector<16x1xf32>
    %cst_9 = arith.constant 1.000000e+00 : f32
    %23 = vector.broadcast %cst_9 : f32 to vector<16x1xf32>
    %24 = arith.addf %23, %22 : vector<16x1xf32>
    %25 = arith.divf %23, %24 : vector<16x1xf32>
    %26 = tpu.iota {dimensions = array<i32: 1>} : vector<16x2xi32>
    %c0_i32 = arith.constant 0 : i32
    %27 = vector.broadcast %c0_i32 : i32 to vector<16x2xi32>
    %28 = arith.cmpi eq, %26, %27 : vector<16x2xi32>
    %cst_10 = arith.constant 1.000000e+00 : f32
    %29 = vector.broadcast %cst_10 : f32 to vector<16x1xf32>
    %30 = arith.subf %29, %25 : vector<16x1xf32>
    %31 = vector.shape_cast %25 : vector<16x1xf32> to vector<16x1xf32>
    %32 = vector.broadcast %31 : vector<16x1xf32> to vector<16x2xf32>
    %33 = vector.shape_cast %30 : vector<16x1xf32> to vector<16x1xf32>
    %34 = vector.broadcast %33 : vector<16x1xf32> to vector<16x2xf32>
    %35 = arith.select %28, %32, %34 : vector<16x2xi1>, vector<16x2xf32>
    %c0_11 = arith.constant 0 : index
    %c0_12 = arith.constant 0 : index
    %36 = vector.load %arg3[%c0_11, %c0_12] : memref<16x2xf32, #tpu.memory_space<vmem>>, vector<16x2xf32>
    tpu.vector_store %arg3[%c0_11, %c0_12], %35 {strides = array<i32>} : memref<16x2xf32, #tpu.memory_space<vmem>>, vector<16x2xf32>,
    return
  }
  func.func @transform_0(%arg0: i32) -> (i32, i32) {
    %c0_i32 = arith.constant 0 : i32
    %c0_i32_0 = arith.constant 0 : i32
    return %arg0, %c0_i32 : i32, i32
  }
  func.func @transform_1(%arg0: i32) -> (i32, i32) {
    %c0_i32 = arith.constant 0 : i32
    %c0_i32_0 = arith.constant 0 : i32
    %c0_i32_1 = arith.constant 0 : i32
    return %c0_i32, %c0_i32_0 : i32, i32
  }
  func.func @transform_2(%arg0: i32) -> (i32, i32) {
    %c0_i32 = arith.constant 0 : i32
    %c0_i32_0 = arith.constant 0 : i32
    return %arg0, %c0_i32 : i32, i32
  }
}

</mosaic_0001>

<llo_original>
// kernel: tpu_custom_call.1
$region0: #{tpu_custom_call.1}
  #allocation0 [shape = 'u32[]', space=smem, size = 0x4, offset = 0x4, fixed_abs, tag = 'smem constant byte address 0x4 - core index']
  #allocation1 [shape = 'u32[144,128]{1,0:T(1,128)}', space=vmem, size = 0x12000, scoped, tag = 'internal scratch']
  %s0 = inlined_call_operand.vmem [shape: f32[16,4], index: 0, kind: input, shape index: {}]
  %s1 = inlined_call_operand.vmem [shape: f32[8,128], index: 1, kind: input, shape index: {}]
  %s2 = inlined_call_operand.vmem [shape: f32[16,2], index: 2, kind: output, shape index: {}]
  %s3 = sld [smem:[#allocation0]]
  $region18: #{tpu_custom_call.1} parent=0
    _
  %s5 = ssub.s32 1, %s3
  %s6 = scalar_select 0, %s5, %s3
  // Predicated region
  $region2: #{tpu_custom_call.1} parent=0 // pred_check
    _
  $region3: #{tpu_custom_call.1} parent=0 // pred_check_branch
    %8 = sbr.rel (0) target = $region5
  $region4: #{tpu_custom_call.1} parent=0 // pred_region
    _
  $region5: #{tpu_custom_call.1} parent=0 // pred_fallthru
    _
  // Predicated region
  $region6: #{tpu_custom_call.1} parent=0 // pred_check
    _
  $region7: #{tpu_custom_call.1} parent=0 // pred_check_branch
    %10 = sbr.rel (0) target = $region9
  $region8: #{tpu_custom_call.1} parent=0 // pred_region
    _
  $region9: #{tpu_custom_call.1} parent=0 // pred_fallthru
    _
  %v11 = vld [vmem:[%s0] sm:$0xff]
  %v12 = vld [vmem:[%s0 + $0x8] sm:$0xff]
  %v13 = vld [vmem:[%s1] sm:$0xf]
  %v14 = vld [vmem:[%s1 + $0x4] sm:$0x1]
  %v15 = vld [vmem:[%s1 + $0x5] sm:$0x3]
  %v16 = vlaneseq
  %v17 = vshrl.u32 %v16, 7
  %v18 = vsub.s32 0, %v17
  %v19 = vrot.slane %v14, %v18
  %vm20 = vcmask 31744
  %v22 = vsel %vm20, %v11, 0
  %v25 = vsel %vm20, %v12, 0
  %vm27 = vcmask 1043456
  %v29 = vsel %vm27, %v13, 0
  %31 = vmatprep.subr.mxu0 0.0
  %32 = vmatpush1.msra.mxu0 %v29
  %33 = vmatprep.subr.mxu0 0.0
  %34 = vmatpush1.msra.mxu0 0.0
  %35 = vmatprep.subr.mxu0 0.0
  %36 = vmatpush1.msra.mxu0 0.0
  %37 = vmatprep.subr.mxu0 0.0
  %38 = vmatpush1.msra.mxu0 0.0
  %39 = vmatprep.subr.mxu0 0.0
  %40 = vmatpush1.msra.mxu0 0.0
  %41 = vmatprep.subr.mxu0 0.0
  %42 = vmatpush1.msra.mxu0 0.0
  %43 = vmatprep.subr.mxu0 0.0
  %44 = vmatpush1.msra.mxu0 0.0
  %45 = vmatprep.subr.mxu0 0.0
  %46 = vmatpush1.msra.mxu0 0.0
  %47 = vmatprep.subr.mxu0 0.0
  %48 = vmatpush1.msra.mxu0 0.0
  %49 = vmatprep.subr.mxu0 0.0
  %50 = vmatpush1.msra.mxu0 0.0
  %51 = vmatprep.subr.mxu0 0.0
  %52 = vmatpush1.msra.mxu0 0.0
  %53 = vmatprep.subr.mxu0 0.0
  %54 = vmatpush1.msra.mxu0 0.0
  %55 = vmatprep.subr.mxu0 0.0
  %56 = vmatpush1.msra.mxu0 0.0
  %57 = vmatprep.subr.mxu0 0.0
  %58 = vmatpush1.msra.mxu0 0.0
  %59 = vmatprep.subr.mxu0 0.0
  %60 = vmatpush1.msra.mxu0 0.0
  %61 = vmatprep.subr.mxu0 0.0
  %62 = vmatpush1.msra.mxu0 0.0
  %63 = vmatprep.subr.mxu0 0.0
  %64 = vmatpush1.msra.mxu0 0.0
  %65 = vmatprep.subr.mxu0 0.0
  %66 = vmatpush1.msra.mxu0 0.0
  %67 = vmatprep.subr.mxu0 0.0
  %68 = vmatpush1.msra.mxu0 0.0
  %69 = vmatprep.subr.mxu0 0.0
  %70 = vmatpush1.msra.mxu0 0.0
  %71 = vmatprep.subr.mxu0 0.0
  %72 = vmatpush1.msra.mxu0 0.0
  %73 = vmatprep.subr.mxu0 0.0
  %74 = vmatpush1.msra.mxu0 0.0
  %75 = vmatprep.subr.mxu0 0.0
  %76 = vmatpush1.msra.mxu0 0.0
  %77 = vmatprep.subr.mxu0 0.0
  %78 = vmatpush1.msra.mxu0 0.0
  %79 = vmatprep.subr.mxu0 0.0
  %80 = vmatpush1.msra.mxu0 0.0
  %81 = vmatprep.subr.mxu0 0.0
  %82 = vmatpush1.msra.mxu0 0.0
  %83 = vmatprep.subr.mxu0 0.0
  %84 = vmatpush1.msra.mxu0 0.0
  %85 = vmatprep.subr.mxu0 0.0
  %86 = vmatpush1.msra.mxu0 0.0
  %87 = vmatprep.subr.mxu0 0.0
  %88 = vmatpush1.msra.mxu0 0.0
  %89 = vmatprep.subr.mxu0 0.0
  %90 = vmatpush1.msra.mxu0 0.0
  %91 = vmatprep.subr.mxu0 0.0
  %92 = vmatpush1.msra.mxu0 0.0
  %93 = vmatprep.subr.mxu0 0.0
  %94 = vmatpush1.msra.mxu0 0.0
  %95 = vmatprep.mubr.f32.mxu0 0.0
  %96 = vmatmul.mubr.f32.gmra.mrb[0].mxu0 %v22
  %v97 = vpop.f32.mrb[0].mxu0
  %v98 = vadd.f32 %v19, %v97
  %v99 = vpop.f32.mrb[0].mxu0
  %100 = vmatprep.mubr.f32.mxu0 0.0
  %101 = vmatmul.mubr.f32.gmra.mrb[0].mxu0 %v25
  %v102 = vpop.f32.mrb[0].mxu0
  %v103 = vadd.f32 %v19, %v102
  %v104 = vpop.f32.mrb[0].mxu0
  %105 = vdwg.mxu0
  %v106 = vmax.f32 %v98, 0.0
  %v107 = vmax.f32 %v103, 0.0
  %v109 = vrot.slane %v15, 1
  %v111 = vsub.f32 %v15, %v109
  %v112 = vld [vmem:[%s1 + $0x7] sm:$0x1]
  %114 = vrot.lane.b32.xlu0 %v112, 127
  %v115 = vpop.permute.xlu0 %114
  %v117 = vsub.f32 %v112, %v115
  %v118 = vlaneseq
  %v119 = vshrl.u32 %v118, 7
  %v120 = vsub.s32 0, %v119
  %v121 = vrot.slane %v111, %v120
  %v122 = vmul.f32 %v106, %v121
  %v123 = vmul.f32 %v107, %v121
  %124 = vadd.xlane.f32.xlu0 %v122
  %v125 = vpop.xlane.xlu0 %124
  %126 = vadd.xlane.f32.xlu0 %v123
  %v127 = vpop.xlane.xlu0 %126
  %v128 = vlaneseq
  %v129 = vshrl.u32 %v128, 7
  %v130 = vsub.s32 0, %v129
  %v131 = vrot.slane %v117, %v130
  %v132 = vadd.f32 %v125, %v131
  %v133 = vadd.f32 %v127, %v131
  %v134 = vxor.u32 %v132, 2147483648
  %v135 = vxor.u32 %v133, 2147483648
  %v136 = vmul.f32 %v134, 1.442695
  %v137 = vpow.pop %v136
  %v138 = vmul.f32 %v135, 1.442695
  %v139 = vpow.pop %v138
  %v140 = vadd.f32 %v137, 1.0
  %v141 = vadd.f32 %v139, 1.0
  %v142 = vrcp.pop %v140
  %v143 = vmul.f32 1.0, %v142
  %v144 = vrcp.pop %v141
  %v145 = vmul.f32 1.0, %v144
  %v146 = vlaneseq
  %v147 = vand.u32 %v146, 127
  %vm148 = vcmp.eq.s32.totalorder %v147, 0
  %v149 = vsub.f32 1.0, %v143
  %v150 = vsub.f32 1.0, %v145
  %152 = vset.pattern.permute.xlu0 0
  %153 = vperm.xlu0 %152, %v143
  %v154 = vpop.permute.xlu0 %153
  %157 = vset.pattern.permute.xlu0 0
  %158 = vperm.xlu0 %157, %v145
  %v159 = vpop.permute.xlu0 %158
  %162 = vset.pattern.permute.xlu0 0
  %163 = vperm.xlu0 %162, %v149
  %v164 = vpop.permute.xlu0 %163
  %167 = vset.pattern.permute.xlu0 0
  %168 = vperm.xlu0 %167, %v150
  %v169 = vpop.permute.xlu0 %168
  %v171 = vsel %vm148, %v154, %v164
  %v172 = vsel %vm148, %v159, %v169
  %vm173 = vcmask 15360
  %174 = vst.msk [vmem:[%s2] sm:$0xff] %vm173, %v171
  %175 = vst.msk [vmem:[%s2 + $0x8] sm:$0xff] %vm173, %v172
  // Predicated region
  $region10: #{tpu_custom_call.1} parent=0 // pred_check
    _
  $region11: #{tpu_custom_call.1} parent=0 // pred_check_branch
    %177 = sbr.rel (0) target = $region13
  $region12: #{tpu_custom_call.1} parent=0 // pred_region
    _
  $region13: #{tpu_custom_call.1} parent=0 // pred_fallthru
    _
  // Predicated region
  $region14: #{tpu_custom_call.1} parent=0 // pred_check
    _
  $region15: #{tpu_custom_call.1} parent=0 // pred_check_branch
    %179 = sbr.rel (0) target = $region17
  $region16: #{tpu_custom_call.1} parent=0 // pred_region
    _
  $region17: #{tpu_custom_call.1} parent=0 // pred_fallthru
    _

</llo_original>
